<compile_context>
chip_gen: v7x
topology: tpu7x:2x2x1
jax: 0.10.0
libtpu: 0.0.40
codegen_flags: <defaults>
</compile_context>

<pallas_src>
import functools

import jax
import jax.numpy as jnp
from jax.experimental import pallas as pl
from jax.experimental.pallas import tpu as pltpu  # noqa: F401  (kept for TPU-specific tuning hooks)

# ------------------------- configuration (small shapes) -------------------------
N, IN_C, H, W = 2, 3, 16, 16          # input image: NCHW (RGB implied by MEAN/STD)
FEAT_C = 32                           # backbone feature channels
NUM_CLASSES = 8                       # segmentation logits channels
NUM_OUTPUTS = 3                       # MonoDepthRec num_outputs (RGB reconstruction)

LENGTH = 8                            # len(self.decoder.blocks)
UP_STAGE_INDICES = [1, 3, 5, 7]
IDLC = [1, 0, 0, 0]                   # decoder connection gates (exercise one merge)
NEXT_STEP_POS = {s: 1 for s in range(LENGTH + 1)}   # pos of decoder.blocks[f'step_{s}']
UP_SCALES = (0.5, 0.25, 0.125, 0.0625)              # upsamples[i] = UP_SCALES[i] * feat0

# reconstruct constants, host-folded and baked into the kernel as Python scalars:
#   (sigmoid(x) - MEAN) / STD == sigmoid(x) * (1/STD) - MEAN/STD
_MEAN_T = (0.485, 0.456, 0.406)
_STD_T = (0.229, 0.224, 0.225)
_INV_STD_T = tuple(1.0 / s for s in _STD_T)
_SHIFT_T = tuple(m / s for m, s in zip(_MEAN_T, _STD_T))


# ----------------- decoder traced at build time (static coefficients) -----------------
def _decoder_coeffs():
    """Trace MonoDepthRec.forward_upsampling symbolically.

    UpSkipBlocks are identity stubs and upsamples[i] == UP_SCALES[i] * feat0, so every
    feature tuple element is a static linear combination {feat_idx: coeff}.  Faithful to
    unsqueeze_merge_squeeze's in-place aliasing (the merged tensor appears twice).
    Returns the (c0, c1) coefficients of x[-1], the feature consumed by multires.
    """
    merge_dec = dict(zip(UP_STAGE_INDICES, IDLC))
    x = [{0: 1.0}, {1: 1.0}]          # symbolic handles for (feat0, feat1)
    up_idx = 0
    for step in range(LENGTH):
        # TODO(synk): real MonoSeg decoder UpSkipBlock for step_{step} is external to
        # this module; treated as identity on the feature tuple here.
        if step in UP_STAGE_INDICES:
            if merge_dec[step]:
                idx = NEXT_STEP_POS[step + 1]
                cur = dict(x[idx - 1])
                cur[0] = cur.get(0, 0.0) + UP_SCALES[up_idx]   # x_cur += upsamples[up_idx]
                x = x[: idx - 1] + [cur, cur] + x[idx + 1:]
            up_idx += 1
    last = x[-1]
    return float(last.get(0, 0.0)), float(last.get(1, 0.0))


# ------------------------------- fused Pallas kernel ---------------------------------
def _fused_forward_kernel(c0,
                          x_ref, w0_ref, b0_ref, w1_ref, b1_ref,
                          wh_ref, bh_ref, wm0_ref,
                          logits_ref, image_ref):
    """Whole-batch fused forward (single invocation, everything VMEM-resident).

    x_ref:      (N, Cin, HW)                   channels-major input (plain NCHW reshape)
    w0_ref:     (FEAT_C, Cin), b0_ref (FEAT_C, 1)     stem 1x1 conv
    w1_ref:     (FEAT_C, FEAT_C), b1_ref (FEAT_C, 1)  stem2 1x1 conv
    wh_ref:     (NUM_CLASSES + NUM_OUTPUTS, FEAT_C)   fused [seg_head; c1*multires] weight
    bh_ref:     (NUM_CLASSES + NUM_OUTPUTS, 1)        fused [seg_head; multires] bias
    wm0_ref:    (NUM_OUTPUTS, FEAT_C)                 c0 * multires weight (feat0 path)
    logits_ref: (N, NUM_CLASSES, HW)                  lane-dense stores (HW last)
    image_ref:  (N, NUM_OUTPUTS, HW)
    feat0/feat1 never leave VMEM/vregs; only logits & image are written to HBM.
    """
    w0 = w0_ref[...]
    b0 = b0_ref[...]
    w1 = w1_ref[...]
    b1 = b1_ref[...]
    wh = wh_ref[...]
    bh = bh_ref[...]

    n_batch, cin, hw = x_ref.shape

    for b in range(n_batch):                      # static, tiny (N=2)
        x_b = x_ref[b]                            # (Cin, HW)

        # TODO(synk): real backbone (resnet18 encoder + SwiftNet-style pyramid decoder)
        # is external; replaced by deterministic 1x1-conv stubs.
        # Stem (Cin=3): 3 VPU broadcast-FMAs instead of a K=3 MXU matmul.
        feat0 = w0[:, 0:1] * x_b[0:1, :]          # (FEAT_C,1)*(1,HW) -> (FEAT_C,HW)
        for c in range(1, cin):
            feat0 = feat0 + w0[:, c:c + 1] * x_b[c:c + 1, :]
        feat0 = feat0 + b0                        # (FEAT_C, HW) + (FEAT_C, 1)

        # Stem2: MXU matmul, channels-major (Cout, Cin) @ (Cin, HW).
        feat1 = jnp.dot(w1, feat0, preferred_element_type=jnp.float32) + b1

        # Fused heads: [seg_head ; c1*multires] @ feat1 in one MXU call.
        head = jnp.dot(wh, feat1, preferred_element_type=jnp.float32) + bh
        logits = head[:NUM_CLASSES]               # (NUM_CLASSES, HW)
        rec = head[NUM_CLASSES:]                  # (NUM_OUTPUTS, HW)
        if c0 != 0.0:                             # static decoder coefficient
            rec = rec + jnp.dot(wm0_ref[...], feat0, preferred_element_type=jnp.float32)

        logits_ref[b] = logits.astype(logits_ref.dtype)   # lane-dense (8, 256) slab

        # reconstruct: sigmoid -> *1/STD -> -MEAN/STD.  Per-channel constants are
        # compile-time scalars selected by a sublane iota (no tensor operands).
        sig = jax.nn.sigmoid(rec)
        rid = jax.lax.broadcasted_iota(jnp.int32, rec.shape, 0)
        inv = jnp.full(rec.shape, _INV_STD_T[-1], jnp.float32)
        sh = jnp.full(rec.shape, _SHIFT_T[-1], jnp.float32)
        for ch in range(NUM_OUTPUTS - 1):
            inv = jnp.where(rid == ch, _INV_STD_T[ch], inv)
            sh = jnp.where(rid == ch, _SHIFT_T[ch], sh)
        image_ref[b] = (sig * inv - sh).astype(image_ref.dtype)   # lane-dense (3, 256)


# ------------------------------ model (glue in JAX) -----------------------------------
def init_params(key):
    k1, k2, k3, k4 = jax.random.split(key, 4)
    # Channels-major weights (Cout, Cin) so the kernel computes W @ X with HW on the
    # lane axis and no transposes anywhere; biases are column vectors (Cout, 1).
    return {
        "stem_w": 0.1 * jax.random.normal(k1, (FEAT_C, IN_C), jnp.float32),
        "stem_b": jnp.zeros((FEAT_C, 1), jnp.float32),
        "stem2_w": 0.1 * jax.random.normal(k2, (FEAT_C, FEAT_C), jnp.float32),
        "stem2_b": jnp.zeros((FEAT_C, 1), jnp.float32),
        "seg_head_w": 0.1 * jax.random.normal(k3, (NUM_CLASSES, FEAT_C), jnp.float32),
        "seg_head_b": jnp.zeros((NUM_CLASSES, 1), jnp.float32),
        "multires_w": 0.1 * jax.random.normal(k4, (NUM_OUTPUTS, FEAT_C), jnp.float32),
        "multires_b": jnp.zeros((NUM_OUTPUTS, 1), jnp.float32),
    }


def semseg_forward(params, x):
    n, cin, h, w = x.shape
    hw = h * w

    # Plain reshape only (no transpose, no HBM round trip): NCHW -> (N, Cin, HW).
    x_chw = x.reshape(n, cin, hw)

    # Decoder (identity blocks + gated scale-adds) folded at trace time to a static
    # linear combination x[-1] = c0*feat0 + c1*feat1.
    c0, c1 = _decoder_coeffs()

    # Host-side head fusion: one MXU call covers seg head + (c1-scaled) multires head.
    w_head = jnp.concatenate([params["seg_head_w"], c1 * params["multires_w"]], axis=0)
    b_head = jnp.concatenate([params["seg_head_b"], params["multires_b"]], axis=0)
    wm0 = c0 * params["multires_w"]

    kernel = functools.partial(_fused_forward_kernel, c0)

    # Single launch, no grid: all operands are tiny and live whole in VMEM.
    # TODO(synk): with a real backbone, tile HW into >=128-lane blocks on a "parallel"
    # grid axis (v7x dual-TC) and size tiles for v7x's 64 MiB VMEM.
    logits_chw, image_chw = pl.pallas_call(
        kernel,
        out_shape=(
            jax.ShapeDtypeStruct((n, NUM_CLASSES, hw), jnp.float32),
            jax.ShapeDtypeStruct((n, NUM_OUTPUTS, hw), jnp.float32),
        ),
    )(
        x_chw,
        params["stem_w"], params["stem_b"],
        params["stem2_w"], params["stem2_b"],
        w_head, b_head, wm0,
    )

    # Plain reshapes back to the module's NCHW output contract (no transposes).
    logits = logits_chw.reshape(n, NUM_CLASSES, h, w)
    image = image_chw.reshape(n, NUM_OUTPUTS, h, w)
    return {"logits": logits, "image_reconstruction": image}


# -------------------------------------- main -------------------------------------------
if __name__ == "__main__":
    key = jax.random.PRNGKey(0)
    k_param, k_x = jax.random.split(key)
    params = init_params(k_param)
    x = jax.random.normal(k_x, (N, IN_C, H, W), jnp.float32)

    out = jax.jit(semseg_forward)(params, x)
    out = jax.block_until_ready(out)

    assert out["logits"].shape == (N, NUM_CLASSES, H, W)
    assert out["image_reconstruction"].shape == (N, 3, H, W)
    assert out["image_reconstruction"].dtype == jnp.float32
    print("KERNEL_OK")
</pallas_src>

<mosaic_0001>
module attributes {stable_mosaic.version = 11 : i64} {
  func.func @_fused_forward_kernel(%arg0: memref<2x3x256xf32, #tpu.memory_space<vmem>>, %arg1: memref<32x3xf32, #tpu.memory_space<vmem>>, %arg2: memref<32x1xf32, #tpu.memory_space<vmem>>, %arg3: memref<32x32xf32, #tpu.memory_space<vmem>>, %arg4: memref<32x1xf32, #tpu.memory_space<vmem>>, %arg5: memref<11x32xf32, #tpu.memory_space<vmem>>, %arg6: memref<11x1xf32, #tpu.memory_space<vmem>>, %arg7: memref<3x32xf32, #tpu.memory_space<vmem>>, %arg8: memref<2x8x256xf32, #tpu.memory_space<vmem>>, %arg9: memref<2x3x256xf32, #tpu.memory_space<vmem>>) attributes {dimension_semantics = [], scalar_prefetch = 0 : i64, scratch_operands = 0 : i64, tpu.core_type = #tpu.core_type<tc>} {
    %c0 = arith.constant 0 : index
    %c0_0 = arith.constant 0 : index
    %0 = vector.load %arg1[%c0, %c0_0] : memref<32x3xf32, #tpu.memory_space<vmem>>, vector<32x3xf32>
    %c0_1 = arith.constant 0 : index
    %c0_2 = arith.constant 0 : index
    %1 = vector.load %arg2[%c0_1, %c0_2] : memref<32x1xf32, #tpu.memory_space<vmem>>, vector<32x1xf32>
    %c0_3 = arith.constant 0 : index
    %c0_4 = arith.constant 0 : index
    %2 = vector.load %arg3[%c0_3, %c0_4] : memref<32x32xf32, #tpu.memory_space<vmem>>, vector<32x32xf32>
    %c0_5 = arith.constant 0 : index
    %c0_6 = arith.constant 0 : index
    %3 = vector.load %arg4[%c0_5, %c0_6] : memref<32x1xf32, #tpu.memory_space<vmem>>, vector<32x1xf32>
    %c0_7 = arith.constant 0 : index
    %c0_8 = arith.constant 0 : index
    %4 = vector.load %arg5[%c0_7, %c0_8] : memref<11x32xf32, #tpu.memory_space<vmem>>, vector<11x32xf32>
    %c0_9 = arith.constant 0 : index
    %c0_10 = arith.constant 0 : index
    %5 = vector.load %arg6[%c0_9, %c0_10] : memref<11x1xf32, #tpu.memory_space<vmem>>, vector<11x1xf32>
    %c0_11 = arith.constant 0 : index
    %c0_12 = arith.constant 0 : index
    %c0_13 = arith.constant 0 : index
    %6 = vector.load %arg0[%c0_11, %c0_12, %c0_13] : memref<2x3x256xf32, #tpu.memory_space<vmem>>, vector<1x3x256xf32>
    %7 = vector.shape_cast %6 : vector<1x3x256xf32> to vector<3x256xf32>
    %8 = vector.extract_strided_slice %0 {offsets = [0, 0], sizes = [32, 1], strides = [1, 1]} : vector<32x3xf32> to vector<32x1xf32>
    %9 = vector.extract_strided_slice %7 {offsets = [0, 0], sizes = [1, 256], strides = [1, 1]} : vector<3x256xf32> to vector<1x256xf32>
    %10 = vector.broadcast %8 : vector<32x1xf32> to vector<32x256xf32>
    %11 = vector.broadcast %9 : vector<1x256xf32> to vector<32x256xf32>
    %12 = arith.mulf %10, %11 : vector<32x256xf32>
    %13 = vector.extract_strided_slice %0 {offsets = [0, 1], sizes = [32, 1], strides = [1, 1]} : vector<32x3xf32> to vector<32x1xf32>
    %14 = vector.extract_strided_slice %7 {offsets = [1, 0], sizes = [1, 256], strides = [1, 1]} : vector<3x256xf32> to vector<1x256xf32>
    %15 = vector.broadcast %13 : vector<32x1xf32> to vector<32x256xf32>
    %16 = vector.broadcast %14 : vector<1x256xf32> to vector<32x256xf32>
    %17 = arith.mulf %15, %16 : vector<32x256xf32>
    %18 = arith.addf %12, %17 : vector<32x256xf32>
    %19 = vector.extract_strided_slice %0 {offsets = [0, 2], sizes = [32, 1], strides = [1, 1]} : vector<32x3xf32> to vector<32x1xf32>
    %20 = vector.extract_strided_slice %7 {offsets = [2, 0], sizes = [1, 256], strides = [1, 1]} : vector<3x256xf32> to vector<1x256xf32>
    %21 = vector.broadcast %19 : vector<32x1xf32> to vector<32x256xf32>
    %22 = vector.broadcast %20 : vector<1x256xf32> to vector<32x256xf32>
    %23 = arith.mulf %21, %22 : vector<32x256xf32>
    %24 = arith.addf %18, %23 : vector<32x256xf32>
    %25 = vector.broadcast %1 : vector<32x1xf32> to vector<32x256xf32>
    %26 = arith.addf %24, %25 : vector<32x256xf32>
    %cst = arith.constant dense<0.000000e+00> : vector<32x256xf32>
    %27 = tpu.matmul %2, %26, %cst {dimension_numbers = #tpu.dot_dimension_numbers<[1], [0], [0], [1], [0, 0, 1, 1], [], []>} : vector<32x32xf32>, vector<32x256xf32>, vector<32x256xf32> -> vector<32x256xf32>
    %28 = vector.broadcast %3 : vector<32x1xf32> to vector<32x256xf32>
    %29 = arith.addf %27, %28 : vector<32x256xf32>
    %cst_14 = arith.constant dense<0.000000e+00> : vector<11x256xf32>
    %30 = tpu.matmul %4, %29, %cst_14 {dimension_numbers = #tpu.dot_dimension_numbers<[1], [0], [0], [1], [0, 0, 1, 1], [], []>} : vector<11x32xf32>, vector<32x256xf32>, vector<11x256xf32> -> vector<11x256xf32>
    %31 = vector.broadcast %5 : vector<11x1xf32> to vector<11x256xf32>
    %32 = arith.addf %30, %31 : vector<11x256xf32>
    %33 = vector.extract_strided_slice %32 {offsets = [0, 0], sizes = [8, 256], strides = [1, 1]} : vector<11x256xf32> to vector<8x256xf32>
    %34 = vector.extract_strided_slice %32 {offsets = [8, 0], sizes = [3, 256], strides = [1, 1]} : vector<11x256xf32> to vector<3x256xf32>
    %c0_15 = arith.constant 0 : index
    %c0_16 = arith.constant 0 : index
    %35 = vector.load %arg7[%c0_15, %c0_16] : memref<3x32xf32, #tpu.memory_space<vmem>>, vector<3x32xf32>
    %cst_17 = arith.constant dense<0.000000e+00> : vector<3x256xf32>
    %36 = tpu.matmul %35, %26, %cst_17 {dimension_numbers = #tpu.dot_dimension_numbers<[1], [0], [0], [1], [0, 0, 1, 1], [], []>} : vector<3x32xf32>, vector<32x256xf32>, vector<3x256xf32> -> vector<3x256xf32>
    %37 = arith.addf %34, %36 : vector<3x256xf32>
    %c0_18 = arith.constant 0 : index
    %c0_19 = arith.constant 0 : index
    %c0_20 = arith.constant 0 : index
    %38 = vector.load %arg8[%c0_18, %c0_19, %c0_20] : memref<2x8x256xf32, #tpu.memory_space<vmem>>, vector<1x8x256xf32>
    %39 = vector.shape_cast %38 : vector<1x8x256xf32> to vector<8x256xf32>
    %40 = vector.shape_cast %33 : vector<8x256xf32> to vector<1x8x256xf32>
    tpu.vector_store %arg8[%c0_18, %c0_19, %c0_20], %40 {strides = array<i32>} : memref<2x8x256xf32, #tpu.memory_space<vmem>>, vector<1x8x256xf32>,
    %41 = arith.negf %37 : vector<3x256xf32>
    %42 = math.exp %41 : vector<3x256xf32>
    %cst_21 = arith.constant 1.000000e+00 : f32
    %43 = vector.broadcast %cst_21 : f32 to vector<3x256xf32>
    %44 = arith.addf %43, %42 : vector<3x256xf32>
    %45 = arith.divf %43, %44 : vector<3x256xf32>
    %46 = tpu.iota {dimensions = array<i32: 0>} : vector<3x256xi32>
    %cst_22 = arith.constant 4.44444466 : f32
    %47 = vector.broadcast %cst_22 : f32 to vector<3x256xf32>
    %cst_23 = arith.constant 1.80444443 : f32
    %48 = vector.broadcast %cst_23 : f32 to vector<3x256xf32>
    %c0_i32 = arith.constant 0 : i32
    %49 = vector.broadcast %c0_i32 : i32 to vector<3x256xi32>
    %50 = arith.cmpi eq, %46, %49 : vector<3x256xi32>
    %cst_24 = arith.constant 4.36681223 : f32
    %51 = vector.broadcast %cst_24 : f32 to vector<3x256xf32>
    %52 = arith.select %50, %51, %47 : vector<3x256xi1>, vector<3x256xf32>
    %c0_i32_25 = arith.constant 0 : i32
    %53 = vector.broadcast %c0_i32_25 : i32 to vector<3x256xi32>
    %54 = arith.cmpi eq, %46, %53 : vector<3x256xi32>
    %cst_26 = arith.constant 2.11790395 : f32
    %55 = vector.broadcast %cst_26 : f32 to vector<3x256xf32>
    %56 = arith.select %54, %55, %48 : vector<3x256xi1>, vector<3x256xf32>
    %c1_i32 = arith.constant 1 : i32
    %57 = vector.broadcast %c1_i32 : i32 to vector<3x256xi32>
    %58 = arith.cmpi eq, %46, %57 : vector<3x256xi32>
    %cst_27 = arith.constant 4.46428585 : f32
    %59 = vector.broadcast %cst_27 : f32 to vector<3x256xf32>
    %60 = arith.select %58, %59, %52 : vector<3x256xi1>, vector<3x256xf32>
    %c1_i32_28 = arith.constant 1 : i32
    %61 = vector.broadcast %c1_i32_28 : i32 to vector<3x256xi32>
    %62 = arith.cmpi eq, %46, %61 : vector<3x256xi32>
    %cst_29 = arith.constant 2.03571439 : f32
    %63 = vector.broadcast %cst_29 : f32 to vector<3x256xf32>
    %64 = arith.select %62, %63, %56 : vector<3x256xi1>, vector<3x256xf32>
    %65 = arith.mulf %45, %60 : vector<3x256xf32>
    %66 = arith.subf %65, %64 : vector<3x256xf32>
    %c0_30 = arith.constant 0 : index
    %c0_31 = arith.constant 0 : index
    %c0_32 = arith.constant 0 : index
    %67 = vector.load %arg9[%c0_30, %c0_31, %c0_32] : memref<2x3x256xf32, #tpu.memory_space<vmem>>, vector<1x3x256xf32>
    %68 = vector.shape_cast %67 : vector<1x3x256xf32> to vector<3x256xf32>
    %69 = vector.shape_cast %66 : vector<3x256xf32> to vector<1x3x256xf32>
    tpu.vector_store %arg9[%c0_30, %c0_31, %c0_32], %69 {strides = array<i32>} : memref<2x3x256xf32, #tpu.memory_space<vmem>>, vector<1x3x256xf32>,
    %c1 = arith.constant 1 : index
    %c0_33 = arith.constant 0 : index
    %c0_34 = arith.constant 0 : index
    %70 = vector.load %arg0[%c1, %c0_33, %c0_34] : memref<2x3x256xf32, #tpu.memory_space<vmem>>, vector<1x3x256xf32>
    %71 = vector.shape_cast %70 : vector<1x3x256xf32> to vector<3x256xf32>
    %72 = vector.extract_strided_slice %0 {offsets = [0, 0], sizes = [32, 1], strides = [1, 1]} : vector<32x3xf32> to vector<32x1xf32>
    %73 = vector.extract_strided_slice %71 {offsets = [0, 0], sizes = [1, 256], strides = [1, 1]} : vector<3x256xf32> to vector<1x256xf32>
    %74 = vector.broadcast %72 : vector<32x1xf32> to vector<32x256xf32>
    %75 = vector.broadcast %73 : vector<1x256xf32> to vector<32x256xf32>
    %76 = arith.mulf %74, %75 : vector<32x256xf32>
    %77 = vector.extract_strided_slice %0 {offsets = [0, 1], sizes = [32, 1], strides = [1, 1]} : vector<32x3xf32> to vector<32x1xf32>
    %78 = vector.extract_strided_slice %71 {offsets = [1, 0], sizes = [1, 256], strides = [1, 1]} : vector<3x256xf32> to vector<1x256xf32>
    %79 = vector.broadcast %77 : vector<32x1xf32> to vector<32x256xf32>
    %80 = vector.broadcast %78 : vector<1x256xf32> to vector<32x256xf32>
    %81 = arith.mulf %79, %80 : vector<32x256xf32>
    %82 = arith.addf %76, %81 : vector<32x256xf32>
    %83 = vector.extract_strided_slice %0 {offsets = [0, 2], sizes = [32, 1], strides = [1, 1]} : vector<32x3xf32> to vector<32x1xf32>
    %84 = vector.extract_strided_slice %71 {offsets = [2, 0], sizes = [1, 256], strides = [1, 1]} : vector<3x256xf32> to vector<1x256xf32>
    %85 = vector.broadcast %83 : vector<32x1xf32> to vector<32x256xf32>
    %86 = vector.broadcast %84 : vector<1x256xf32> to vector<32x256xf32>
    %87 = arith.mulf %85, %86 : vector<32x256xf32>
    %88 = arith.addf %82, %87 : vector<32x256xf32>
    %89 = vector.broadcast %1 : vector<32x1xf32> to vector<32x256xf32>
    %90 = arith.addf %88, %89 : vector<32x256xf32>
    %cst_35 = arith.constant dense<0.000000e+00> : vector<32x256xf32>
    %91 = tpu.matmul %2, %90, %cst_35 {dimension_numbers = #tpu.dot_dimension_numbers<[1], [0], [0], [1], [0, 0, 1, 1], [], []>} : vector<32x32xf32>, vector<32x256xf32>, vector<32x256xf32> -> vector<32x256xf32>
    %92 = vector.broadcast %3 : vector<32x1xf32> to vector<32x256xf32>
    %93 = arith.addf %91, %92 : vector<32x256xf32>
    %cst_36 = arith.constant dense<0.000000e+00> : vector<11x256xf32>
    %94 = tpu.matmul %4, %93, %cst_36 {dimension_numbers = #tpu.dot_dimension_numbers<[1], [0], [0], [1], [0, 0, 1, 1], [], []>} : vector<11x32xf32>, vector<32x256xf32>, vector<11x256xf32> -> vector<11x256xf32>
    %95 = vector.broadcast %5 : vector<11x1xf32> to vector<11x256xf32>
    %96 = arith.addf %94, %95 : vector<11x256xf32>
    %97 = vector.extract_strided_slice %96 {offsets = [0, 0], sizes = [8, 256], strides = [1, 1]} : vector<11x256xf32> to vector<8x256xf32>
    %98 = vector.extract_strided_slice %96 {offsets = [8, 0], sizes = [3, 256], strides = [1, 1]} : vector<11x256xf32> to vector<3x256xf32>
    %c0_37 = arith.constant 0 : index
    %c0_38 = arith.constant 0 : index
    %99 = vector.load %arg7[%c0_37, %c0_38] : memref<3x32xf32, #tpu.memory_space<vmem>>, vector<3x32xf32>
    %cst_39 = arith.constant dense<0.000000e+00> : vector<3x256xf32>
    %100 = tpu.matmul %99, %90, %cst_39 {dimension_numbers = #tpu.dot_dimension_numbers<[1], [0], [0], [1], [0, 0, 1, 1], [], []>} : vector<3x32xf32>, vector<32x256xf32>, vector<3x256xf32> -> vector<3x256xf32>
    %101 = arith.addf %98, %100 : vector<3x256xf32>
    %c1_40 = arith.constant 1 : index
    %c0_41 = arith.constant 0 : index
    %c0_42 = arith.constant 0 : index
    %102 = vector.load %arg8[%c1_40, %c0_41, %c0_42] : memref<2x8x256xf32, #tpu.memory_space<vmem>>, vector<1x8x256xf32>
    %103 = vector.shape_cast %102 : vector<1x8x256xf32> to vector<8x256xf32>
    %104 = vector.shape_cast %97 : vector<8x256xf32> to vector<1x8x256xf32>
    tpu.vector_store %arg8[%c1_40, %c0_41, %c0_42], %104 {strides = array<i32>} : memref<2x8x256xf32, #tpu.memory_space<vmem>>, vector<1x8x256xf32>,
    %105 = arith.negf %101 : vector<3x256xf32>
    %106 = math.exp %105 : vector<3x256xf32>
    %cst_43 = arith.constant 1.000000e+00 : f32
    %107 = vector.broadcast %cst_43 : f32 to vector<3x256xf32>
    %108 = arith.addf %107, %106 : vector<3x256xf32>
    %109 = arith.divf %107, %108 : vector<3x256xf32>
    %110 = tpu.iota {dimensions = array<i32: 0>} : vector<3x256xi32>
    %cst_44 = arith.constant 4.44444466 : f32
    %111 = vector.broadcast %cst_44 : f32 to vector<3x256xf32>
    %cst_45 = arith.constant 1.80444443 : f32
    %112 = vector.broadcast %cst_45 : f32 to vector<3x256xf32>
    %c0_i32_46 = arith.constant 0 : i32
    %113 = vector.broadcast %c0_i32_46 : i32 to vector<3x256xi32>
    %114 = arith.cmpi eq, %110, %113 : vector<3x256xi32>
    %cst_47 = arith.constant 4.36681223 : f32
    %115 = vector.broadcast %cst_47 : f32 to vector<3x256xf32>
    %116 = arith.select %114, %115, %111 : vector<3x256xi1>, vector<3x256xf32>
    %c0_i32_48 = arith.constant 0 : i32
    %117 = vector.broadcast %c0_i32_48 : i32 to vector<3x256xi32>
    %118 = arith.cmpi eq, %110, %117 : vector<3x256xi32>
    %cst_49 = arith.constant 2.11790395 : f32
    %119 = vector.broadcast %cst_49 : f32 to vector<3x256xf32>
    %120 = arith.select %118, %119, %112 : vector<3x256xi1>, vector<3x256xf32>
    %c1_i32_50 = arith.constant 1 : i32
    %121 = vector.broadcast %c1_i32_50 : i32 to vector<3x256xi32>
    %122 = arith.cmpi eq, %110, %121 : vector<3x256xi32>
    %cst_51 = arith.constant 4.46428585 : f32
    %123 = vector.broadcast %cst_51 : f32 to vector<3x256xf32>
    %124 = arith.select %122, %123, %116 : vector<3x256xi1>, vector<3x256xf32>
    %c1_i32_52 = arith.constant 1 : i32
    %125 = vector.broadcast %c1_i32_52 : i32 to vector<3x256xi32>
    %126 = arith.cmpi eq, %110, %125 : vector<3x256xi32>
    %cst_53 = arith.constant 2.03571439 : f32
    %127 = vector.broadcast %cst_53 : f32 to vector<3x256xf32>
    %128 = arith.select %126, %127, %120 : vector<3x256xi1>, vector<3x256xf32>
    %129 = arith.mulf %109, %124 : vector<3x256xf32>
    %130 = arith.subf %129, %128 : vector<3x256xf32>
    %c1_54 = arith.constant 1 : index
    %c0_55 = arith.constant 0 : index
    %c0_56 = arith.constant 0 : index
    %131 = vector.load %arg9[%c1_54, %c0_55, %c0_56] : memref<2x3x256xf32, #tpu.memory_space<vmem>>, vector<1x3x256xf32>
    %132 = vector.shape_cast %131 : vector<1x3x256xf32> to vector<3x256xf32>
    %133 = vector.shape_cast %130 : vector<3x256xf32> to vector<1x3x256xf32>
    tpu.vector_store %arg9[%c1_54, %c0_55, %c0_56], %133 {strides = array<i32>} : memref<2x3x256xf32, #tpu.memory_space<vmem>>, vector<1x3x256xf32>,
    return
  }
}

</mosaic_0001>

<llo_original>
// kernel: semseg_forward.1
$region0: #{semseg_forward.1}
  #allocation0 [shape = 'u32[]', space=smem, size = 0x4, offset = 0x4, fixed_abs, tag = 'smem constant byte address 0x4 - core index']
  #allocation1 [shape = 'u32[144,128]{1,0:T(1,128)}', space=vmem, size = 0x12000, scoped, tag = 'internal scratch']
  %s0 = inlined_call_operand.vmem [shape: f32[2,3,256], index: 0, kind: input, shape index: {}]
  %s1 = inlined_call_operand.vmem [shape: f32[32,3], index: 1, kind: input, shape index: {}]
  %s2 = inlined_call_operand.vmem [shape: f32[32,1], index: 2, kind: input, shape index: {}]
  %s3 = inlined_call_operand.vmem [shape: f32[32,32], index: 3, kind: input, shape index: {}]
  %s4 = inlined_call_operand.vmem [shape: f32[32,1], index: 4, kind: input, shape index: {}]
  %s5 = inlined_call_operand.vmem [shape: f32[11,32], index: 5, kind: input, shape index: {}]
  %s6 = inlined_call_operand.vmem [shape: f32[11,1], index: 6, kind: input, shape index: {}]
  %s7 = inlined_call_operand.vmem [shape: f32[3,32], index: 7, kind: input, shape index: {}]
  %s8 = inlined_call_operand.vmem [shape: f32[2,8,256], index: 8, kind: output, shape index: {0}]
  %s9 = inlined_call_operand.vmem [shape: f32[2,3,256], index: 9, kind: output, shape index: {1}]
  %10 = xla_tuple %s8, %s9
  %s11 = sld [smem:[#allocation0]]
  $region50: #{semseg_forward.1} parent=0
    _
  %s13 = ssub.s32 1, %s11
  %s14 = scalar_select 0, %s13, %s11
  // Predicated region
  $region2: #{semseg_forward.1} parent=0 // pred_check
    _
  $region3: #{semseg_forward.1} parent=0 // pred_check_branch
    %16 = sbr.rel (0) target = $region5
  $region4: #{semseg_forward.1} parent=0 // pred_region
    _
  $region5: #{semseg_forward.1} parent=0 // pred_fallthru
    _
  // Predicated region
  $region6: #{semseg_forward.1} parent=0 // pred_check
    _
  $region7: #{semseg_forward.1} parent=0 // pred_check_branch
    %18 = sbr.rel (0) target = $region9
  $region8: #{semseg_forward.1} parent=0 // pred_region
    _
  $region9: #{semseg_forward.1} parent=0 // pred_fallthru
    _
  // Predicated region
  $region10: #{semseg_forward.1} parent=0 // pred_check
    _
  $region11: #{semseg_forward.1} parent=0 // pred_check_branch
    %20 = sbr.rel (0) target = $region13
  $region12: #{semseg_forward.1} parent=0 // pred_region
    _
  $region13: #{semseg_forward.1} parent=0 // pred_fallthru
    _
  // Predicated region
  $region14: #{semseg_forward.1} parent=0 // pred_check
    _
  $region15: #{semseg_forward.1} parent=0 // pred_check_branch
    %22 = sbr.rel (0) target = $region17
  $region16: #{semseg_forward.1} parent=0 // pred_region
    _
  $region17: #{semseg_forward.1} parent=0 // pred_fallthru
    _
  // Predicated region
  $region18: #{semseg_forward.1} parent=0 // pred_check
    _
  $region19: #{semseg_forward.1} parent=0 // pred_check_branch
    %24 = sbr.rel (0) target = $region21
  $region20: #{semseg_forward.1} parent=0 // pred_region
    _
  $region21: #{semseg_forward.1} parent=0 // pred_fallthru
    _
  // Predicated region
  $region22: #{semseg_forward.1} parent=0 // pred_check
    _
  $region23: #{semseg_forward.1} parent=0 // pred_check_branch
    %26 = sbr.rel (0) target = $region25
  $region24: #{semseg_forward.1} parent=0 // pred_region
    _
  $region25: #{semseg_forward.1} parent=0 // pred_fallthru
    _
  // Predicated region
  $region26: #{semseg_forward.1} parent=0 // pred_check
    _
  $region27: #{semseg_forward.1} parent=0 // pred_check_branch
    %28 = sbr.rel (0) target = $region29
  $region28: #{semseg_forward.1} parent=0 // pred_region
    _
  $region29: #{semseg_forward.1} parent=0 // pred_fallthru
    _
  // Predicated region
  $region30: #{semseg_forward.1} parent=0 // pred_check
    _
  $region31: #{semseg_forward.1} parent=0 // pred_check_branch
    %30 = sbr.rel (0) target = $region33
  $region32: #{semseg_forward.1} parent=0 // pred_region
    _
  $region33: #{semseg_forward.1} parent=0 // pred_fallthru
    _
  %v31 = vld [vmem:[%s1] sm:$0xff]
  %v32 = vld [vmem:[%s1 + $0x8] sm:$0xff]
  %v33 = vld [vmem:[%s1 + $0x10] sm:$0xff]
  %v34 = vld [vmem:[%s1 + $0x18] sm:$0xff]
  %v35 = vld [vmem:[%s2] sm:$0xff]
  %v36 = vld [vmem:[%s2 + $0x8] sm:$0xff]
  %v37 = vld [vmem:[%s2 + $0x10] sm:$0xff]
  %v38 = vld [vmem:[%s2 + $0x18] sm:$0xff]
  %v39 = vld [vmem:[%s3] sm:$0xff]
  %v40 = vld [vmem:[%s3 + $0x8] sm:$0xff]
  %v41 = vld [vmem:[%s3 + $0x10] sm:$0xff]
  %v42 = vld [vmem:[%s3 + $0x18] sm:$0xff]
  %v43 = vld [vmem:[%s4] sm:$0xff]
  %v44 = vld [vmem:[%s4 + $0x8] sm:$0xff]
  %v45 = vld [vmem:[%s4 + $0x10] sm:$0xff]
  %v46 = vld [vmem:[%s4 + $0x18] sm:$0xff]
  %v47 = vld [vmem:[%s5] sm:$0xff]
  %v48 = vld [vmem:[%s5 + $0x8] sm:$0x7]
  %v49 = vld [vmem:[%s6] sm:$0xff]
  %v50 = vld [vmem:[%s6 + $0x8] sm:$0x7]
  %v51 = vld [vmem:[%s0] sm:$0x77]
  %53 = vset.pattern.permute.xlu0 0
  %54 = vperm.xlu0 %53, %v31
  %v55 = vpop.permute.xlu0 %54
  %58 = vset.pattern.permute.xlu0 0
  %59 = vperm.xlu0 %58, %v32
  %v60 = vpop.permute.xlu0 %59
  %63 = vset.pattern.permute.xlu0 0
  %64 = vperm.xlu0 %63, %v33
  %v65 = vpop.permute.xlu0 %64
  %68 = vset.pattern.permute.xlu0 0
  %69 = vperm.xlu0 %68, %v34
  %v70 = vpop.permute.xlu0 %69
  %v73 = vlaneseq
  %v74 = vshrl.u32 %v73, 7
  %v75 = vsub.s32 0, %v74
  %v76 = vrot.slane %v51, %v75
  %v77 = vlaneseq
  %v78 = vshrl.u32 %v77, 7
  %v79 = vsub.s32 4, %v78
  %v80 = vrot.slane %v51, %v79
  %v83 = vlaneseq
  %v84 = vshrl.u32 %v83, 7
  %v85 = vsub.s32 0, %v84
  %v86 = vrot.slane %v76, %v85
  %v87 = vlaneseq
  %v88 = vshrl.u32 %v87, 7
  %v89 = vsub.s32 0, %v88
  %v90 = vrot.slane %v80, %v89
  %v91 = vmul.f32 %v55, %v86
  %v92 = vmul.f32 %v55, %v90
  %v93 = vmul.f32 %v60, %v86
  %v94 = vmul.f32 %v60, %v90
  %v95 = vmul.f32 %v65, %v86
  %v96 = vmul.f32 %v65, %v90
  %v97 = vmul.f32 %v70, %v86
  %v98 = vmul.f32 %v70, %v90
  %99 = vset.pattern.permute.xlu0 1
  %100 = vperm.xlu0 %99, %v31
  %v101 = vpop.permute.xlu0 %100
  %103 = vset.pattern.permute.xlu0 1
  %104 = vperm.xlu0 %103, %v32
  %v105 = vpop.permute.xlu0 %104
  %107 = vset.pattern.permute.xlu0 1
  %108 = vperm.xlu0 %107, %v33
  %v109 = vpop.permute.xlu0 %108
  %111 = vset.pattern.permute.xlu0 1
  %112 = vperm.xlu0 %111, %v34
  %v113 = vpop.permute.xlu0 %112
  %v115 = vlaneseq
  %v116 = vshrl.u32 %v115, 7
  %v117 = vsub.s32 1, %v116
  %v118 = vrot.slane %v51, %v117
  %v119 = vlaneseq
  %v120 = vshrl.u32 %v119, 7
  %v121 = vsub.s32 5, %v120
  %v122 = vrot.slane %v51, %v121
  %v125 = vlaneseq
  %v126 = vshrl.u32 %v125, 7
  %v127 = vsub.s32 1, %v126
  %v128 = vrot.slane %v118, %v127
  %v129 = vlaneseq
  %v130 = vshrl.u32 %v129, 7
  %v131 = vsub.s32 1, %v130
  %v132 = vrot.slane %v122, %v131
  %v133 = vmul.f32 %v101, %v128
  %v134 = vmul.f32 %v101, %v132
  %v135 = vmul.f32 %v105, %v128
  %v136 = vmul.f32 %v105, %v132
  %v137 = vmul.f32 %v109, %v128
  %v138 = vmul.f32 %v109, %v132
  %v139 = vmul.f32 %v113, %v128
  %v140 = vmul.f32 %v113, %v132
  %v141 = vadd.f32 %v91, %v133
  %v142 = vadd.f32 %v92, %v134
  %v143 = vadd.f32 %v93, %v135
  %v144 = vadd.f32 %v94, %v136
  %v145 = vadd.f32 %v95, %v137
  %v146 = vadd.f32 %v96, %v138
  %v147 = vadd.f32 %v97, %v139
  %v148 = vadd.f32 %v98, %v140
  %149 = vset.pattern.permute.xlu0 2
  %150 = vperm.xlu0 %149, %v31
  %v151 = vpop.permute.xlu0 %150
  %153 = vset.pattern.permute.xlu0 2
  %154 = vperm.xlu0 %153, %v32
  %v155 = vpop.permute.xlu0 %154
  %157 = vset.pattern.permute.xlu0 2
  %158 = vperm.xlu0 %157, %v33
  %v159 = vpop.permute.xlu0 %158
  %161 = vset.pattern.permute.xlu0 2
  %162 = vperm.xlu0 %161, %v34
  %v163 = vpop.permute.xlu0 %162
  %v165 = vlaneseq
  %v166 = vshrl.u32 %v165, 7
  %v167 = vsub.s32 2, %v166
  %v168 = vrot.slane %v51, %v167
  %v169 = vlaneseq
  %v170 = vshrl.u32 %v169, 7
  %v171 = vsub.s32 6, %v170
  %v172 = vrot.slane %v51, %v171
  %v175 = vlaneseq
  %v176 = vshrl.u32 %v175, 7
  %v177 = vsub.s32 2, %v176
  %v178 = vrot.slane %v168, %v177
  %v179 = vlaneseq
  %v180 = vshrl.u32 %v179, 7
  %v181 = vsub.s32 2, %v180
  %v182 = vrot.slane %v172, %v181
  %v183 = vmul.f32 %v151, %v178
  %v184 = vmul.f32 %v151, %v182
  %v185 = vmul.f32 %v155, %v178
  %v186 = vmul.f32 %v155, %v182
  %v187 = vmul.f32 %v159, %v178
  %v188 = vmul.f32 %v159, %v182
  %v189 = vmul.f32 %v163, %v178
  %v190 = vmul.f32 %v163, %v182
  %v191 = vadd.f32 %v141, %v183
  %v192 = vadd.f32 %v142, %v184
  %v193 = vadd.f32 %v143, %v185
  %v194 = vadd.f32 %v144, %v186
  %v195 = vadd.f32 %v145, %v187
  %v196 = vadd.f32 %v146, %v188
  %v197 = vadd.f32 %v147, %v189
  %v198 = vadd.f32 %v148, %v190
  %200 = vset.pattern.permute.xlu0 0
  %201 = vperm.xlu0 %200, %v35
  %v202 = vpop.permute.xlu0 %201
  %205 = vset.pattern.permute.xlu0 0
  %206 = vperm.xlu0 %205, %v36
  %v207 = vpop.permute.xlu0 %206
  %210 = vset.pattern.permute.xlu0 0
  %211 = vperm.xlu0 %210, %v37
  %v212 = vpop.permute.xlu0 %211
  %215 = vset.pattern.permute.xlu0 0
  %216 = vperm.xlu0 %215, %v38
  %v217 = vpop.permute.xlu0 %216
  %v219 = vadd.f32 %v191, %v202
  %v220 = vadd.f32 %v192, %v202
  %v221 = vadd.f32 %v193, %v207
  %v222 = vadd.f32 %v194, %v207
  %v223 = vadd.f32 %v195, %v212
  %v224 = vadd.f32 %v196, %v212
  %v225 = vadd.f32 %v197, %v217
  %v226 = vadd.f32 %v198, %v217
  %228 = vset.pattern.permute.xlu0 0
  %229 = vperm.xlu0 %228, %v43
  %v230 = vpop.permute.xlu0 %229
  %233 = vset.pattern.permute.xlu0 0
  %234 = vperm.xlu0 %233, %v44
  %v235 = vpop.permute.xlu0 %234
  %238 = vset.pattern.permute.xlu0 0
  %239 = vperm.xlu0 %238, %v45
  %v240 = vpop.permute.xlu0 %239
  %243 = vset.pattern.permute.xlu0 0
  %244 = vperm.xlu0 %243, %v46
  %v245 = vpop.permute.xlu0 %244
  %vm247 = vcmask 261120
  %v249 = vsel %vm247, %v39, 0
  %v252 = vsel %vm247, %v40, 0
  %v255 = vsel %vm247, %v41, 0
  %v258 = vsel %vm247, %v42, 0
  %260 = vmatprep.subr.mxu0 %v220
  %261 = vmatpush1.msra.mxu0 %v219
  %262 = vmatprep.subr.mxu0 %v222
  %263 = vmatpush1.msra.mxu0 %v221
  %264 = vmatprep.subr.mxu0 %v224
  %265 = vmatpush1.msra.mxu0 %v223
  %266 = vmatprep.subr.mxu0 %v226
  %267 = vmatpush1.msra.mxu0 %v225
  %268 = vmatprep.subr.mxu0 0.0
  %269 = vmatpush1.msra.mxu0 0.0
  %270 = vmatprep.subr.mxu0 0.0
  %271 = vmatpush1.msra.mxu0 0.0
  %272 = vmatprep.subr.mxu0 0.0
  %273 = vmatpush1.msra.mxu0 0.0
  %274 = vmatprep.subr.mxu0 0.0
  %275 = vmatpush1.msra.mxu0 0.0
  %276 = vmatprep.subr.mxu0 0.0
  %277 = vmatpush1.msra.mxu0 0.0
  %278 = vmatprep.subr.mxu0 0.0
  %279 = vmatpush1.msra.mxu0 0.0
  %280 = vmatprep.subr.mxu0 0.0
  %281 = vmatpush1.msra.mxu0 0.0
  %282 = vmatprep.subr.mxu0 0.0
  %283 = vmatpush1.msra.mxu0 0.0
  %284 = vmatprep.subr.mxu0 0.0
  %285 = vmatpush1.msra.mxu0 0.0
  %286 = vmatprep.subr.mxu0 0.0
  %287 = vmatpush1.msra.mxu0 0.0
  %288 = vmatprep.subr.mxu0 0.0
  %289 = vmatpush1.msra.mxu0 0.0
  %290 = vmatprep.subr.mxu0 0.0
  %291 = vmatpush1.msra.mxu0 0.0
  %292 = vmatprep.subr.mxu0 0.0
  %293 = vmatpush1.msra.mxu0 0.0
  %294 = vmatprep.subr.mxu0 0.0
  %295 = vmatpush1.msra.mxu0 0.0
  %296 = vmatprep.subr.mxu0 0.0
  %297 = vmatpush1.msra.mxu0 0.0
  %298 = vmatprep.subr.mxu0 0.0
  %299 = vmatpush1.msra.mxu0 0.0
  %300 = vmatprep.subr.mxu0 0.0
  %301 = vmatpush1.msra.mxu0 0.0
  %302 = vmatprep.subr.mxu0 0.0
  %303 = vmatpush1.msra.mxu0 0.0
  %304 = vmatprep.subr.mxu0 0.0
  %305 = vmatpush1.msra.mxu0 0.0
  %306 = vmatprep.subr.mxu0 0.0
  %307 = vmatpush1.msra.mxu0 0.0
  %308 = vmatprep.subr.mxu0 0.0
  %309 = vmatpush1.msra.mxu0 0.0
  %310 = vmatprep.subr.mxu0 0.0
  %311 = vmatpush1.msra.mxu0 0.0
  %312 = vmatprep.subr.mxu0 0.0
  %313 = vmatpush1.msra.mxu0 0.0
  %314 = vmatprep.subr.mxu0 0.0
  %315 = vmatpush1.msra.mxu0 0.0
  %316 = vmatprep.subr.mxu0 0.0
  %317 = vmatpush1.msra.mxu0 0.0
  %318 = vmatprep.subr.mxu0 0.0
  %319 = vmatpush1.msra.mxu0 0.0
  %320 = vmatprep.subr.mxu0 0.0
  %321 = vmatpush1.msra.mxu0 0.0
  %322 = vmatprep.subr.mxu0 0.0
  %323 = vmatpush1.msra.mxu0 0.0
  %324 = vmatprep.mubr.f32.mxu0 0.0
  %325 = vmatmul.mubr.f32.gmra.mrb[0].mxu0 %v249
  %v326 = vpop.f32.mrb[0].mxu0
  %v327 = vadd.f32 %v230, %v326
  %v328 = vpop.f32.mrb[0].mxu0
  %v329 = vadd.f32 %v230, %v328
  %330 = vmatprep.mubr.f32.mxu0 0.0
  %331 = vmatmul.mubr.f32.gmra.mrb[0].mxu0 %v252
  %v332 = vpop.f32.mrb[0].mxu0
  %v333 = vadd.f32 %v235, %v332
  %v334 = vpop.f32.mrb[0].mxu0
  %v335 = vadd.f32 %v235, %v334
  %336 = vmatprep.mubr.f32.mxu0 0.0
  %337 = vmatmul.mubr.f32.gmra.mrb[0].mxu0 %v255
  %v338 = vpop.f32.mrb[0].mxu0
  %v339 = vadd.f32 %v240, %v338
  %v340 = vpop.f32.mrb[0].mxu0
  %v341 = vadd.f32 %v240, %v340
  %342 = vmatprep.mubr.f32.mxu0 0.0
  %343 = vmatmul.mubr.f32.gmra.mrb[0].mxu0 %v258
  %v344 = vpop.f32.mrb[0].mxu0
  %v345 = vadd.f32 %v245, %v344
  %v346 = vpop.f32.mrb[0].mxu0
  %v347 = vadd.f32 %v245, %v346
  %348 = vdwg.mxu0
  %350 = vset.pattern.permute.xlu0 0
  %351 = vperm.xlu0 %350, %v49
  %v352 = vpop.permute.xlu0 %351
  %355 = vset.pattern.permute.xlu0 0
  %356 = vperm.xlu0 %355, %v50
  %v357 = vpop.permute.xlu0 %356
  %v360 = vsel %vm247, %v47, 0
  %v363 = vsel %vm247, %v48, 0
  %365 = vmatprep.subr.mxu0 %v329
  %366 = vmatpush1.msra.mxu0 %v327
  %367 = vmatprep.subr.mxu0 %v335
  %368 = vmatpush1.msra.mxu0 %v333
  %369 = vmatprep.subr.mxu0 %v341
  %370 = vmatpush1.msra.mxu0 %v339
  %371 = vmatprep.subr.mxu0 %v347
  %372 = vmatpush1.msra.mxu0 %v345
  %373 = vmatprep.subr.mxu0 0.0
  %374 = vmatpush1.msra.mxu0 0.0
  %375 = vmatprep.subr.mxu0 0.0
  %376 = vmatpush1.msra.mxu0 0.0
  %377 = vmatprep.subr.mxu0 0.0
  %378 = vmatpush1.msra.mxu0 0.0
  %379 = vmatprep.subr.mxu0 0.0
  %380 = vmatpush1.msra.mxu0 0.0
  %381 = vmatprep.subr.mxu0 0.0
  %382 = vmatpush1.msra.mxu0 0.0
  %383 = vmatprep.subr.mxu0 0.0
  %384 = vmatpush1.msra.mxu0 0.0
  %385 = vmatprep.subr.mxu0 0.0
  %386 = vmatpush1.msra.mxu0 0.0
  %387 = vmatprep.subr.mxu0 0.0
  %388 = vmatpush1.msra.mxu0 0.0
  %389 = vmatprep.subr.mxu0 0.0
  %390 = vmatpush1.msra.mxu0 0.0
  %391 = vmatprep.subr.mxu0 0.0
  %392 = vmatpush1.msra.mxu0 0.0
  %393 = vmatprep.subr.mxu0 0.0
  %394 = vmatpush1.msra.mxu0 0.0
  %395 = vmatprep.subr.mxu0 0.0
  %396 = vmatpush1.msra.mxu0 0.0
  %397 = vmatprep.subr.mxu0 0.0
  %398 = vmatpush1.msra.mxu0 0.0
  %399 = vmatprep.subr.mxu0 0.0
  %400 = vmatpush1.msra.mxu0 0.0
  %401 = vmatprep.subr.mxu0 0.0
  %402 = vmatpush1.msra.mxu0 0.0
  %403 = vmatprep.subr.mxu0 0.0
  %404 = vmatpush1.msra.mxu0 0.0
  %405 = vmatprep.subr.mxu0 0.0
  %406 = vmatpush1.msra.mxu0 0.0
  %407 = vmatprep.subr.mxu0 0.0
  %408 = vmatpush1.msra.mxu0 0.0
  %409 = vmatprep.subr.mxu0 0.0
  %410 = vmatpush1.msra.mxu0 0.0
  %411 = vmatprep.subr.mxu0 0.0
  %412 = vmatpush1.msra.mxu0 0.0
  %413 = vmatprep.subr.mxu0 0.0
  %414 = vmatpush1.msra.mxu0 0.0
  %415 = vmatprep.subr.mxu0 0.0
  %416 = vmatpush1.msra.mxu0 0.0
  %417 = vmatprep.subr.mxu0 0.0
  %418 = vmatpush1.msra.mxu0 0.0
  %419 = vmatprep.subr.mxu0 0.0
  %420 = vmatpush1.msra.mxu0 0.0
  %421 = vmatprep.subr.mxu0 0.0
  %422 = vmatpush1.msra.mxu0 0.0
  %423 = vmatprep.subr.mxu0 0.0
  %424 = vmatpush1.msra.mxu0 0.0
  %425 = vmatprep.subr.mxu0 0.0
  %426 = vmatpush1.msra.mxu0 0.0
  %427 = vmatprep.subr.mxu0 0.0
  %428 = vmatpush1.msra.mxu0 0.0
  %429 = vmatprep.mubr.f32.mxu0 0.0
  %430 = vmatmul.mubr.f32.gmra.mrb[0].mxu0 %v360
  %v431 = vpop.f32.mrb[0].mxu0
  %v432 = vadd.f32 %v352, %v431
  %v433 = vpop.f32.mrb[0].mxu0
  %v434 = vadd.f32 %v352, %v433
  %435 = vmatprep.mubr.f32.mxu0 0.0
  %436 = vmatmul.mubr.f32.gmra.mrb[0].mxu0 %v363
  %v437 = vpop.f32.mrb[0].mxu0
  %v438 = vadd.f32 %v357, %v437
  %v439 = vpop.f32.mrb[0].mxu0
  %v440 = vadd.f32 %v357, %v439
  %441 = vdwg.mxu0
  %v442 = vld [vmem:[%s7] sm:$0x7]
  %v444 = vsel %vm247, %v442, 0
  %446 = vmatprep.subr.mxu0 %v220
  %447 = vmatpush1.msra.mxu0 %v219
  %448 = vmatprep.subr.mxu0 %v222
  %449 = vmatpush1.msra.mxu0 %v221
  %450 = vmatprep.subr.mxu0 %v224
  %451 = vmatpush1.msra.mxu0 %v223
  %452 = vmatprep.subr.mxu0 %v226
  %453 = vmatpush1.msra.mxu0 %v225
  %454 = vmatprep.subr.mxu0 0.0
  %455 = vmatpush1.msra.mxu0 0.0
  %456 = vmatprep.subr.mxu0 0.0
  %457 = vmatpush1.msra.mxu0 0.0
  %458 = vmatprep.subr.mxu0 0.0
  %459 = vmatpush1.msra.mxu0 0.0
  %460 = vmatprep.subr.mxu0 0.0
  %461 = vmatpush1.msra.mxu0 0.0
  %462 = vmatprep.subr.mxu0 0.0
  %463 = vmatpush1.msra.mxu0 0.0
  %464 = vmatprep.subr.mxu0 0.0
  %465 = vmatpush1.msra.mxu0 0.0
  %466 = vmatprep.subr.mxu0 0.0
  %467 = vmatpush1.msra.mxu0 0.0
  %468 = vmatprep.subr.mxu0 0.0
  %469 = vmatpush1.msra.mxu0 0.0
  %470 = vmatprep.subr.mxu0 0.0
  %471 = vmatpush1.msra.mxu0 0.0
  %472 = vmatprep.subr.mxu0 0.0
  %473 = vmatpush1.msra.mxu0 0.0
  %474 = vmatprep.subr.mxu0 0.0
  %475 = vmatpush1.msra.mxu0 0.0
  %476 = vmatprep.subr.mxu0 0.0
  %477 = vmatpush1.msra.mxu0 0.0
  %478 = vmatprep.subr.mxu0 0.0
  %479 = vmatpush1.msra.mxu0 0.0
  %480 = vmatprep.subr.mxu0 0.0
  %481 = vmatpush1.msra.mxu0 0.0
  %482 = vmatprep.subr.mxu0 0.0
  %483 = vmatpush1.msra.mxu0 0.0
  %484 = vmatprep.subr.mxu0 0.0
  %485 = vmatpush1.msra.mxu0 0.0
  %486 = vmatprep.subr.mxu0 0.0
  %487 = vmatpush1.msra.mxu0 0.0
  %488 = vmatprep.subr.mxu0 0.0
  %489 = vmatpush1.msra.mxu0 0.0
  %490 = vmatprep.subr.mxu0 0.0
  %491 = vmatpush1.msra.mxu0 0.0
  %492 = vmatprep.subr.mxu0 0.0
  %493 = vmatpush1.msra.mxu0 0.0
  %494 = vmatprep.subr.mxu0 0.0
  %495 = vmatpush1.msra.mxu0 0.0
  %496 = vmatprep.subr.mxu0 0.0
  %497 = vmatpush1.msra.mxu0 0.0
  %498 = vmatprep.subr.mxu0 0.0
  %499 = vmatpush1.msra.mxu0 0.0
  %500 = vmatprep.subr.mxu0 0.0
  %501 = vmatpush1.msra.mxu0 0.0
  %502 = vmatprep.subr.mxu0 0.0
  %503 = vmatpush1.msra.mxu0 0.0
  %504 = vmatprep.subr.mxu0 0.0
  %505 = vmatpush1.msra.mxu0 0.0
  %506 = vmatprep.subr.mxu0 0.0
  %507 = vmatpush1.msra.mxu0 0.0
  %508 = vmatprep.subr.mxu0 0.0
  %509 = vmatpush1.msra.mxu0 0.0
  %510 = vmatprep.mubr.f32.mxu0 0.0
  %511 = vmatmul.mubr.f32.gmra.mrb[0].mxu0 %v444
  %v512 = vpop.f32.mrb[0].mxu0
  %v513 = vadd.f32 0.0, %v512
  %v514 = vpop.f32.mrb[0].mxu0
  %v515 = vadd.f32 0.0, %v514
  %516 = vdwg.mxu0
  %v517 = vadd.f32 %v438, %v513
  %v518 = vadd.f32 %v440, %v515
  %519 = vst [vmem:[%s8] sm:$0xff] %v432
  %520 = vst [vmem:[%s8 + $0x8] sm:$0xff] %v434
  %v521 = vxor.u32 %v517, 2147483648
  %v522 = vxor.u32 %v518, 2147483648
  %v523 = vmul.f32 %v521, 1.442695
  %v524 = vpow.pop %v523
  %v525 = vmul.f32 %v522, 1.442695
  %v526 = vpow.pop %v525
  %v527 = vadd.f32 %v524, 1.0
  %v528 = vadd.f32 %v526, 1.0
  %v529 = vrcp.pop %v527
  %v530 = vmul.f32 1.0, %v529
  %v531 = vrcp.pop %v528
  %v532 = vmul.f32 1.0, %v531
  %v533 = vlaneseq
  %v534 = vshrl.u32 %v533, 7
  %vm535 = vcmp.eq.s32.totalorder %v534, 0
  %v536 = vsel %vm535, 4.366812, 4.4444447
  %v537 = vsel %vm535, 2.117904, 1.8044444
  %vm538 = vcmp.eq.s32.totalorder %v534, 1
  %v539 = vsel %vm538, 4.464286, %v536
  %v540 = vsel %vm538, 2.0357144, %v537
  %v541 = vmul.f32 %v530, %v539
  %v542 = vmul.f32 %v532, %v539
  %v543 = vsub.f32 %v541, %v540
  %v544 = vsub.f32 %v542, %v540
  %v547 = vcombine.low %v543, %v544
  %549 = vst [vmem:[%s9] sm:$0x77] %v547
  %s550 = scalar_lea.vmem %s0, 8
  %v551 = vld [vmem:[%s550] sm:$0x77]
  %v553 = vlaneseq
  %v554 = vshrl.u32 %v553, 7
  %v555 = vsub.s32 0, %v554
  %v556 = vrot.slane %v551, %v555
  %v557 = vlaneseq
  %v558 = vshrl.u32 %v557, 7
  %v559 = vsub.s32 4, %v558
  %v560 = vrot.slane %v551, %v559
  %v563 = vlaneseq
  %v564 = vshrl.u32 %v563, 7
  %v565 = vsub.s32 0, %v564
  %v566 = vrot.slane %v556, %v565
  %v567 = vlaneseq
  %v568 = vshrl.u32 %v567, 7
  %v569 = vsub.s32 0, %v568
  %v570 = vrot.slane %v560, %v569
  %v571 = vmul.f32 %v55, %v566
  %v572 = vmul.f32 %v55, %v570
  %v573 = vmul.f32 %v60, %v566
  %v574 = vmul.f32 %v60, %v570
  %v575 = vmul.f32 %v65, %v566
  %v576 = vmul.f32 %v65, %v570
  %v577 = vmul.f32 %v70, %v566
  %v578 = vmul.f32 %v70, %v570
  %v579 = vlaneseq
  %v580 = vshrl.u32 %v579, 7
  %v581 = vsub.s32 1, %v580
  %v582 = vrot.slane %v551, %v581
  %v583 = vlaneseq
  %v584 = vshrl.u32 %v583, 7
  %v585 = vsub.s32 5, %v584
  %v586 = vrot.slane %v551, %v585
  %v589 = vlaneseq
  %v590 = vshrl.u32 %v589, 7
  %v591 = vsub.s32 1, %v590
  %v592 = vrot.slane %v582, %v591
  %v593 = vlaneseq
  %v594 = vshrl.u32 %v593, 7
  %v595 = vsub.s32 1, %v594
  %v596 = vrot.slane %v586, %v595
  %v597 = vmul.f32 %v101, %v592
  %v598 = vmul.f32 %v101, %v596
  %v599 = vmul.f32 %v105, %v592
  %v600 = vmul.f32 %v105, %v596
  %v601 = vmul.f32 %v109, %v592
  %v602 = vmul.f32 %v109, %v596
  %v603 = vmul.f32 %v113, %v592
  %v604 = vmul.f32 %v113, %v596
  %v605 = vadd.f32 %v571, %v597
  %v606 = vadd.f32 %v572, %v598
  %v607 = vadd.f32 %v573, %v599
  %v608 = vadd.f32 %v574, %v600
  %v609 = vadd.f32 %v575, %v601
  %v610 = vadd.f32 %v576, %v602
  %v611 = vadd.f32 %v577, %v603
  %v612 = vadd.f32 %v578, %v604
  %v613 = vlaneseq
  %v614 = vshrl.u32 %v613, 7
  %v615 = vsub.s32 2, %v614
  %v616 = vrot.slane %v551, %v615
  %v617 = vlaneseq
  %v618 = vshrl.u32 %v617, 7
  %v619 = vsub.s32 6, %v618
  %v620 = vrot.slane %v551, %v619
  %v623 = vlaneseq
  %v624 = vshrl.u32 %v623, 7
  %v625 = vsub.s32 2, %v624
  %v626 = vrot.slane %v616, %v625
  %v627 = vlaneseq
  %v628 = vshrl.u32 %v627, 7
  %v629 = vsub.s32 2, %v628
  %v630 = vrot.slane %v620, %v629
  %v631 = vmul.f32 %v151, %v626
  %v632 = vmul.f32 %v151, %v630
  %v633 = vmul.f32 %v155, %v626
  %v634 = vmul.f32 %v155, %v630
  %v635 = vmul.f32 %v159, %v626
  %v636 = vmul.f32 %v159, %v630
  %v637 = vmul.f32 %v163, %v626
  %v638 = vmul.f32 %v163, %v630
  %v639 = vadd.f32 %v605, %v631
  %v640 = vadd.f32 %v606, %v632
  %v641 = vadd.f32 %v607, %v633
  %v642 = vadd.f32 %v608, %v634
  %v643 = vadd.f32 %v609, %v635
  %v644 = vadd.f32 %v610, %v636
  %v645 = vadd.f32 %v611, %v637
  %v646 = vadd.f32 %v612, %v638
  %v647 = vadd.f32 %v639, %v202
  %v648 = vadd.f32 %v640, %v202
  %v649 = vadd.f32 %v641, %v207
  %v650 = vadd.f32 %v642, %v207
  %v651 = vadd.f32 %v643, %v212
  %v652 = vadd.f32 %v644, %v212
  %v653 = vadd.f32 %v645, %v217
  %v654 = vadd.f32 %v646, %v217
  %655 = vmatprep.subr.mxu0 %v648
  %656 = vmatpush1.msra.mxu0 %v647
  %657 = vmatprep.subr.mxu0 %v650
  %658 = vmatpush1.msra.mxu0 %v649
  %659 = vmatprep.subr.mxu0 %v652
  %660 = vmatpush1.msra.mxu0 %v651
  %661 = vmatprep.subr.mxu0 %v654
  %662 = vmatpush1.msra.mxu0 %v653
  %663 = vmatprep.subr.mxu0 0.0
  %664 = vmatpush1.msra.mxu0 0.0
  %665 = vmatprep.subr.mxu0 0.0
  %666 = vmatpush1.msra.mxu0 0.0
  %667 = vmatprep.subr.mxu0 0.0
  %668 = vmatpush1.msra.mxu0 0.0
  %669 = vmatprep.subr.mxu0 0.0
  %670 = vmatpush1.msra.mxu0 0.0
  %671 = vmatprep.subr.mxu0 0.0
  %672 = vmatpush1.msra.mxu0 0.0
  %673 = vmatprep.subr.mxu0 0.0
  %674 = vmatpush1.msra.mxu0 0.0
  %675 = vmatprep.subr.mxu0 0.0
  %676 = vmatpush1.msra.mxu0 0.0
  %677 = vmatprep.subr.mxu0 0.0
  %678 = vmatpush1.msra.mxu0 0.0
  %679 = vmatprep.subr.mxu0 0.0
  %680 = vmatpush1.msra.mxu0 0.0
  %681 = vmatprep.subr.mxu0 0.0
  %682 = vmatpush1.msra.mxu0 0.0
  %683 = vmatprep.subr.mxu0 0.0
  %684 = vmatpush1.msra.mxu0 0.0
  %685 = vmatprep.subr.mxu0 0.0
  %686 = vmatpush1.msra.mxu0 0.0
  %687 = vmatprep.subr.mxu0 0.0
  %688 = vmatpush1.msra.mxu0 0.0
  %689 = vmatprep.subr.mxu0 0.0
  %690 = vmatpush1.msra.mxu0 0.0
  %691 = vmatprep.subr.mxu0 0.0
  %692 = vmatpush1.msra.mxu0 0.0
  %693 = vmatprep.subr.mxu0 0.0
  %694 = vmatpush1.msra.mxu0 0.0
  %695 = vmatprep.subr.mxu0 0.0
  %696 = vmatpush1.msra.mxu0 0.0
  %697 = vmatprep.subr.mxu0 0.0
  %698 = vmatpush1.msra.mxu0 0.0
  %699 = vmatprep.subr.mxu0 0.0
  %700 = vmatpush1.msra.mxu0 0.0
  %701 = vmatprep.subr.mxu0 0.0
  %702 = vmatpush1.msra.mxu0 0.0
  %703 = vmatprep.subr.mxu0 0.0
  %704 = vmatpush1.msra.mxu0 0.0
  %705 = vmatprep.subr.mxu0 0.0
  %706 = vmatpush1.msra.mxu0 0.0
  %707 = vmatprep.subr.mxu0 0.0
  %708 = vmatpush1.msra.mxu0 0.0
  %709 = vmatprep.subr.mxu0 0.0
  %710 = vmatpush1.msra.mxu0 0.0
  %711 = vmatprep.subr.mxu0 0.0
  %712 = vmatpush1.msra.mxu0 0.0
  %713 = vmatprep.subr.mxu0 0.0
  %714 = vmatpush1.msra.mxu0 0.0
  %715 = vmatprep.subr.mxu0 0.0
  %716 = vmatpush1.msra.mxu0 0.0
  %717 = vmatprep.subr.mxu0 0.0
  %718 = vmatpush1.msra.mxu0 0.0
  %719 = vmatprep.mubr.f32.mxu0 0.0
  %720 = vmatmul.mubr.f32.gmra.mrb[0].mxu0 %v249
  %v721 = vpop.f32.mrb[0].mxu0
  %v722 = vadd.f32 %v230, %v721
  %v723 = vpop.f32.mrb[0].mxu0
  %v724 = vadd.f32 %v230, %v723
  %725 = vmatprep.mubr.f32.mxu0 0.0
  %726 = vmatmul.mubr.f32.gmra.mrb[0].mxu0 %v252
  %v727 = vpop.f32.mrb[0].mxu0
  %v728 = vadd.f32 %v235, %v727
  %v729 = vpop.f32.mrb[0].mxu0
  %v730 = vadd.f32 %v235, %v729
  %731 = vmatprep.mubr.f32.mxu0 0.0
  %732 = vmatmul.mubr.f32.gmra.mrb[0].mxu0 %v255
  %v733 = vpop.f32.mrb[0].mxu0
  %v734 = vadd.f32 %v240, %v733
  %v735 = vpop.f32.mrb[0].mxu0
  %v736 = vadd.f32 %v240, %v735
  %737 = vmatprep.mubr.f32.mxu0 0.0
  %738 = vmatmul.mubr.f32.gmra.mrb[0].mxu0 %v258
  %v739 = vpop.f32.mrb[0].mxu0
  %v740 = vadd.f32 %v245, %v739
  %v741 = vpop.f32.mrb[0].mxu0
  %v742 = vadd.f32 %v245, %v741
  %743 = vdwg.mxu0
  %744 = vmatprep.subr.mxu0 %v724
  %745 = vmatpush1.msra.mxu0 %v722
  %746 = vmatprep.subr.mxu0 %v730
  %747 = vmatpush1.msra.mxu0 %v728
  %748 = vmatprep.subr.mxu0 %v736
  %749 = vmatpush1.msra.mxu0 %v734
  %750 = vmatprep.subr.mxu0 %v742
  %751 = vmatpush1.msra.mxu0 %v740
  %752 = vmatprep.subr.mxu0 0.0
  %753 = vmatpush1.msra.mxu0 0.0
  %754 = vmatprep.subr.mxu0 0.0
  %755 = vmatpush1.msra.mxu0 0.0
  %756 = vmatprep.subr.mxu0 0.0
  %757 = vmatpush1.msra.mxu0 0.0
  %758 = vmatprep.subr.mxu0 0.0
  %759 = vmatpush1.msra.mxu0 0.0
  %760 = vmatprep.subr.mxu0 0.0
  %761 = vmatpush1.msra.mxu0 0.0
  %762 = vmatprep.subr.mxu0 0.0
  %763 = vmatpush1.msra.mxu0 0.0
  %764 = vmatprep.subr.mxu0 0.0
  %765 = vmatpush1.msra.mxu0 0.0
  %766 = vmatprep.subr.mxu0 0.0
  %767 = vmatpush1.msra.mxu0 0.0
  %768 = vmatprep.subr.mxu0 0.0
  %769 = vmatpush1.msra.mxu0 0.0
  %770 = vmatprep.subr.mxu0 0.0
  %771 = vmatpush1.msra.mxu0 0.0
  %772 = vmatprep.subr.mxu0 0.0
  %773 = vmatpush1.msra.mxu0 0.0
  %774 = vmatprep.subr.mxu0 0.0
  %775 = vmatpush1.msra.mxu0 0.0
  %776 = vmatprep.subr.mxu0 0.0
  %777 = vmatpush1.msra.mxu0 0.0
  %778 = vmatprep.subr.mxu0 0.0
  %779 = vmatpush1.msra.mxu0 0.0
  %780 = vmatprep.subr.mxu0 0.0
  %781 = vmatpush1.msra.mxu0 0.0
  %782 = vmatprep.subr.mxu0 0.0
  %783 = vmatpush1.msra.mxu0 0.0
  %784 = vmatprep.subr.mxu0 0.0
  %785 = vmatpush1.msra.mxu0 0.0
  %786 = vmatprep.subr.mxu0 0.0
  %787 = vmatpush1.msra.mxu0 0.0
  %788 = vmatprep.subr.mxu0 0.0
  %789 = vmatpush1.msra.mxu0 0.0
  %790 = vmatprep.subr.mxu0 0.0
  %791 = vmatpush1.msra.mxu0 0.0
  %792 = vmatprep.subr.mxu0 0.0
  %793 = vmatpush1.msra.mxu0 0.0
  %794 = vmatprep.subr.mxu0 0.0
  %795 = vmatpush1.msra.mxu0 0.0
  %796 = vmatprep.subr.mxu0 0.0
  %797 = vmatpush1.msra.mxu0 0.0
  %798 = vmatprep.subr.mxu0 0.0
  %799 = vmatpush1.msra.mxu0 0.0
  %800 = vmatprep.subr.mxu0 0.0
  %801 = vmatpush1.msra.mxu0 0.0
  %802 = vmatprep.subr.mxu0 0.0
  %803 = vmatpush1.msra.mxu0 0.0
  %804 = vmatprep.subr.mxu0 0.0
  %805 = vmatpush1.msra.mxu0 0.0
  %806 = vmatprep.subr.mxu0 0.0
  %807 = vmatpush1.msra.mxu0 0.0
  %808 = vmatprep.mubr.f32.mxu0 0.0
  %809 = vmatmul.mubr.f32.gmra.mrb[0].mxu0 %v360
  %v810 = vpop.f32.mrb[0].mxu0
  %v811 = vadd.f32 %v352, %v810
  %v812 = vpop.f32.mrb[0].mxu0
  %v813 = vadd.f32 %v352, %v812
  %814 = vmatprep.mubr.f32.mxu0 0.0
  %815 = vmatmul.mubr.f32.gmra.mrb[0].mxu0 %v363
  %v816 = vpop.f32.mrb[0].mxu0
  %v817 = vadd.f32 %v357, %v816
  %v818 = vpop.f32.mrb[0].mxu0
  %v819 = vadd.f32 %v357, %v818
  %820 = vdwg.mxu0
  %v821 = vld [vmem:[%s7] sm:$0x7]
  %v823 = vsel %vm247, %v821, 0
  %825 = vmatprep.subr.mxu0 %v648
  %826 = vmatpush1.msra.mxu0 %v647
  %827 = vmatprep.subr.mxu0 %v650
  %828 = vmatpush1.msra.mxu0 %v649
  %829 = vmatprep.subr.mxu0 %v652
  %830 = vmatpush1.msra.mxu0 %v651
  %831 = vmatprep.subr.mxu0 %v654
  %832 = vmatpush1.msra.mxu0 %v653
  %833 = vmatprep.subr.mxu0 0.0
  %834 = vmatpush1.msra.mxu0 0.0
  %835 = vmatprep.subr.mxu0 0.0
  %836 = vmatpush1.msra.mxu0 0.0
  %837 = vmatprep.subr.mxu0 0.0
  %838 = vmatpush1.msra.mxu0 0.0
  %839 = vmatprep.subr.mxu0 0.0
  %840 = vmatpush1.msra.mxu0 0.0
  %841 = vmatprep.subr.mxu0 0.0
  %842 = vmatpush1.msra.mxu0 0.0
  %843 = vmatprep.subr.mxu0 0.0
  %844 = vmatpush1.msra.mxu0 0.0
  %845 = vmatprep.subr.mxu0 0.0
  %846 = vmatpush1.msra.mxu0 0.0
  %847 = vmatprep.subr.mxu0 0.0
  %848 = vmatpush1.msra.mxu0 0.0
  %849 = vmatprep.subr.mxu0 0.0
  %850 = vmatpush1.msra.mxu0 0.0
  %851 = vmatprep.subr.mxu0 0.0
  %852 = vmatpush1.msra.mxu0 0.0
  %853 = vmatprep.subr.mxu0 0.0
  %854 = vmatpush1.msra.mxu0 0.0
  %855 = vmatprep.subr.mxu0 0.0
  %856 = vmatpush1.msra.mxu0 0.0
  %857 = vmatprep.subr.mxu0 0.0
  %858 = vmatpush1.msra.mxu0 0.0
  %859 = vmatprep.subr.mxu0 0.0
  %860 = vmatpush1.msra.mxu0 0.0
  %861 = vmatprep.subr.mxu0 0.0
  %862 = vmatpush1.msra.mxu0 0.0
  %863 = vmatprep.subr.mxu0 0.0
  %864 = vmatpush1.msra.mxu0 0.0
  %865 = vmatprep.subr.mxu0 0.0
  %866 = vmatpush1.msra.mxu0 0.0
  %867 = vmatprep.subr.mxu0 0.0
  %868 = vmatpush1.msra.mxu0 0.0
  %869 = vmatprep.subr.mxu0 0.0
  %870 = vmatpush1.msra.mxu0 0.0
  %871 = vmatprep.subr.mxu0 0.0
  %872 = vmatpush1.msra.mxu0 0.0
  %873 = vmatprep.subr.mxu0 0.0
  %874 = vmatpush1.msra.mxu0 0.0
  %875 = vmatprep.subr.mxu0 0.0
  %876 = vmatpush1.msra.mxu0 0.0
  %877 = vmatprep.subr.mxu0 0.0
  %878 = vmatpush1.msra.mxu0 0.0
  %879 = vmatprep.subr.mxu0 0.0
  %880 = vmatpush1.msra.mxu0 0.0
  %881 = vmatprep.subr.mxu0 0.0
  %882 = vmatpush1.msra.mxu0 0.0
  %883 = vmatprep.subr.mxu0 0.0
  %884 = vmatpush1.msra.mxu0 0.0
  %885 = vmatprep.subr.mxu0 0.0
  %886 = vmatpush1.msra.mxu0 0.0
  %887 = vmatprep.subr.mxu0 0.0
  %888 = vmatpush1.msra.mxu0 0.0
  %889 = vmatprep.mubr.f32.mxu0 0.0
  %890 = vmatmul.mubr.f32.gmra.mrb[0].mxu0 %v823
  %v891 = vpop.f32.mrb[0].mxu0
  %v892 = vadd.f32 0.0, %v891
  %v893 = vpop.f32.mrb[0].mxu0
  %v894 = vadd.f32 0.0, %v893
  %895 = vdwg.mxu0
  %v896 = vadd.f32 %v817, %v892
  %v897 = vadd.f32 %v819, %v894
  %s898 = scalar_lea.vmem %s8, 16
  %899 = vst [vmem:[%s898] sm:$0xff] %v811
  %900 = vst [vmem:[%s898 + $0x8] sm:$0xff] %v813
  %v901 = vxor.u32 %v896, 2147483648
  %v902 = vxor.u32 %v897, 2147483648
  %v903 = vmul.f32 %v901, 1.442695
  %v904 = vpow.pop %v903
  %v905 = vmul.f32 %v902, 1.442695
  %v906 = vpow.pop %v905
  %v907 = vadd.f32 %v904, 1.0
  %v908 = vadd.f32 %v906, 1.0
  %v909 = vrcp.pop %v907
  %v910 = vmul.f32 1.0, %v909
  %v911 = vrcp.pop %v908
  %v912 = vmul.f32 1.0, %v911
  %v913 = vmul.f32 %v910, %v539
  %v914 = vmul.f32 %v912, %v539
  %v915 = vsub.f32 %v913, %v540
  %v916 = vsub.f32 %v914, %v540
  %v919 = vcombine.low %v915, %v916
  %s921 = scalar_lea.vmem %s9, 8
  %922 = vst [vmem:[%s921] sm:$0x77] %v919
  // Predicated region
  $region34: #{semseg_forward.1} parent=0 // pred_check
    _
  $region35: #{semseg_forward.1} parent=0 // pred_check_branch
    %924 = sbr.rel (0) target = $region37
  $region36: #{semseg_forward.1} parent=0 // pred_region
    _
  $region37: #{semseg_forward.1} parent=0 // pred_fallthru
    _
  // Predicated region
  $region38: #{semseg_forward.1} parent=0 // pred_check
    _
  $region39: #{semseg_forward.1} parent=0 // pred_check_branch
    %926 = sbr.rel (0) target = $region41
  $region40: #{semseg_forward.1} parent=0 // pred_region
    _
  $region41: #{semseg_forward.1} parent=0 // pred_fallthru
    _
  // Predicated region
  $region42: #{semseg_forward.1} parent=0 // pred_check
    _
  $region43: #{semseg_forward.1} parent=0 // pred_check_branch
    %928 = sbr.rel (0) target = $region45
  $region44: #{semseg_forward.1} parent=0 // pred_region
    _
  $region45: #{semseg_forward.1} parent=0 // pred_fallthru
    _
  // Predicated region
  $region46: #{semseg_forward.1} parent=0 // pred_check
    _
  $region47: #{semseg_forward.1} parent=0 // pred_check_branch
    %930 = sbr.rel (0) target = $region49
  $region48: #{semseg_forward.1} parent=0 // pred_region
    _
  $region49: #{semseg_forward.1} parent=0 // pred_fallthru
    _

</llo_original>
